<compile_context>
chip_gen: v7x
topology: tpu7x:2x2x1
jax: 0.10.0
libtpu: 0.0.40
codegen_flags: <defaults>
</compile_context>

<pallas_src>
import functools

import jax
import jax.numpy as jnp
from jax.experimental import pallas as pl
from jax.experimental.pallas import tpu as pltpu


_NEG_LARGE = -1e30  # padding logit for extra class columns (exp -> 0, finite)


def _round_up(x, m):
    return (x + m - 1) // m * m


def _focal_loss_kernel(pred_ref, label_ref, out_ref, *, alpha, gamma, n_valid, tb):
    """One batch tile: per-row focal loss via log-sum-exp; partial sum -> SMEM."""
    i = pl.program_id(0)

    pred = pred_ref[...].astype(jnp.float32)            # (TB, Dp) logits
    label = label_ref[...]                               # (TB, 1) int32

    # --- log-sum-exp over classes (no full softmax normalize) ---
    m = jnp.max(pred, axis=-1, keepdims=True)            # (TB, 1)
    z = pred - m                                          # (TB, Dp)
    s = jnp.sum(jnp.exp(z), axis=-1, keepdims=True)       # (TB, 1), >= 1

    # --- gather shifted logit of the true class via one-hot mask ---
    col = jax.lax.broadcasted_iota(jnp.int32, z.shape, 1)
    onehot = (col == label).astype(jnp.float32)           # (TB, Dp)
    z_t = jnp.sum(z * onehot, axis=-1, keepdims=True)     # (TB, 1)

    log_pt = z_t - jnp.log(s)                             # (TB, 1), finite, <= 0
    pt = jnp.exp(log_pt)                                  # true-class probability
    q = 1.0 - pt

    # (1 - pt) ** gamma: integer gamma -> pure VALU multiplies (no EUP pow)
    if float(gamma) == int(gamma) and 0 <= int(gamma) <= 8:
        w = jnp.ones_like(q)
        for _ in range(int(gamma)):
            w = w * q
    else:
        w = jnp.where(q > 0.0,
                      jnp.exp(gamma * jnp.log(jnp.maximum(q, 1e-38))),
                      jnp.zeros_like(q))

    loss = -alpha * w * log_pt                            # (TB, 1)

    # mask out batch-padding rows so they contribute 0 to the sum
    row = jax.lax.broadcasted_iota(jnp.int32, loss.shape, 0) + i * tb
    loss = jnp.where(row < n_valid, loss, 0.0)

    out_ref[0, 0] = jnp.sum(loss)                         # per-tile partial sum


def focal_loss(pred, label, alpha=0.25, gamma=2.0, reduction="mean"):
    """Pallas TPU focal loss. pred: (B, D) float32 logits, label: (B,) int32."""
    assert reduction in ("mean", "sum"), "kernel implements 'mean'/'sum' reduction"
    B, D = pred.shape

    # lane-dense class dim: pad D up to a multiple of 128
    Dp = _round_up(max(D, 128), 128)

    # batch tile: largest slab that keeps double-buffered inputs + in-kernel
    # intermediates comfortably under the scoped-VMEM default on all gens
    # (v5e 16 MiB / v6e 32 MiB / v7x 32 MiB); ~4 MiB per (TB, Dp) f32 slab.
    tile_budget_bytes = 4 * 1024 * 1024
    tb = max(8, (tile_budget_bytes // (Dp * 4)) // 8 * 8)
    tb = min(tb, 1024, _round_up(B, 8))
    Bp = _round_up(B, tb)
    num_tiles = Bp // tb

    pred_p = jnp.full((Bp, Dp), _NEG_LARGE, dtype=jnp.float32)
    pred_p = pred_p.at[:B, :D].set(pred.astype(jnp.float32))
    label_p = jnp.zeros((Bp, 1), dtype=jnp.int32)
    label_p = label_p.at[:B, 0].set(label.astype(jnp.int32))

    kernel = functools.partial(
        _focal_loss_kernel,
        alpha=float(alpha), gamma=float(gamma), n_valid=B, tb=tb,
    )

    partial_sums = pl.pallas_call(
        kernel,
        out_shape=jax.ShapeDtypeStruct((num_tiles, 1), jnp.float32),
        grid=(num_tiles,),
        in_specs=[
            pl.BlockSpec((tb, Dp), lambda i: (i, 0)),
            pl.BlockSpec((tb, 1), lambda i: (i, 0)),
        ],
        # scalar partial sum per tile lives naturally in SMEM (no lane-sparse
        # VMEM writeback); "parallel" grid axis -> megacore sharding on v7x.
        out_specs=pl.BlockSpec((1, 1), lambda i: (i, 0), memory_space=pltpu.SMEM),
        compiler_params=pltpu.CompilerParams(
            dimension_semantics=("parallel",),
            vmem_limit_bytes=32 * 1024 * 1024,
        ),
        cost_estimate=pl.CostEstimate(
            flops=6 * Bp * Dp,
            transcendentals=Bp * Dp + 4 * Bp,
            bytes_accessed=Bp * Dp * 4 + Bp * 4 + num_tiles * 4,
        ),
    )(pred_p, label_p)

    total = jnp.sum(partial_sums)
    if reduction == "mean":
        return total / B
    return total


def focal_loss_ref(pred, label, alpha=0.25, gamma=2.0):
    """Pure-JAX reference matching the PyTorch module (mean reduction)."""
    p = jax.nn.softmax(pred, axis=-1)
    onehot = jax.nn.one_hot(label, pred.shape[-1], dtype=pred.dtype)
    pt = jnp.sum(p * onehot, axis=-1)
    loss = -alpha * jnp.power(1.0 - pt, gamma) * jnp.log(pt)
    return jnp.mean(loss)


if __name__ == "__main__":
    key = jax.random.PRNGKey(0)
    k_pred, k_label = jax.random.split(key)

    B, D = 8, 32
    pred = jax.random.normal(k_pred, (B, D), dtype=jnp.float32)
    label = jax.random.randint(k_label, (B,), 0, D, dtype=jnp.int32)

    out = focal_loss(pred, label)
    jax.block_until_ready(out)

    ref = focal_loss_ref(pred, label)
    assert jnp.allclose(out, ref, atol=1e-5, rtol=1e-5), (out, ref)

    print("KERNEL_OK")
</pallas_src>

<mosaic_0001>
module attributes {stable_mosaic.version = 11 : i64} {
  func.func @_focal_loss_kernel(%arg0: i32, %arg1: memref<8x128xf32, #tpu.memory_space<vmem>>, %arg2: memref<8x1xi32, #tpu.memory_space<vmem>>, %arg3: memref<1x1xf32, #tpu.memory_space<smem>>) attributes {dimension_semantics = [#tpu.dimension_semantics<parallel>], iteration_bounds = array<i64: 1>, scalar_prefetch = 0 : i64, scratch_operands = 0 : i64, tpu.core_type = #tpu.core_type<tc>, window_params = [{transform_indices = @transform_0, window_bounds = array<i64: 8, 128>}, {transform_indices = @transform_1, window_bounds = array<i64: 8, 1>}, {transform_indices = @transform_2, window_bounds = array<i64: 1, 1>}]} {
    %c0 = arith.constant 0 : index
    %c0_0 = arith.constant 0 : index
    %0 = vector.load %arg1[%c0, %c0_0] : memref<8x128xf32, #tpu.memory_space<vmem>>, vector<8x128xf32>
    %c0_1 = arith.constant 0 : index
    %c0_2 = arith.constant 0 : index
    %1 = vector.load %arg2[%c0_1, %c0_2] : memref<8x1xi32, #tpu.memory_space<vmem>>, vector<8x1xi32>
    %cst = arith.constant dense<0xFF800000> : vector<8xf32>
    %2 = vector.multi_reduction <maximumf>, %0, %cst [1] : vector<8x128xf32> to vector<8xf32>
    %3 = vector.shape_cast %2 : vector<8xf32> to vector<8x1xf32>
    %4 = vector.broadcast %3 : vector<8x1xf32> to vector<8x128xf32>
    %5 = arith.subf %0, %4 : vector<8x128xf32>
    %6 = math.exp %5 : vector<8x128xf32>
    %cst_3 = arith.constant dense<0.000000e+00> : vector<8xf32>
    %7 = vector.multi_reduction <add>, %6, %cst_3 [1] : vector<8x128xf32> to vector<8xf32>
    %8 = vector.shape_cast %7 : vector<8xf32> to vector<8x1xf32>
    %9 = tpu.iota {dimensions = array<i32: 1>} : vector<8x128xi32>
    %10 = vector.broadcast %1 : vector<8x1xi32> to vector<8x128xi32>
    %11 = arith.cmpi eq, %9, %10 : vector<8x128xi32>
    %12 = arith.extui %11 : vector<8x128xi1> to vector<8x128xi32>
    %13 = arith.sitofp %12 : vector<8x128xi32> to vector<8x128xf32>
    %14 = arith.mulf %5, %13 : vector<8x128xf32>
    %cst_4 = arith.constant dense<0.000000e+00> : vector<8xf32>
    %15 = vector.multi_reduction <add>, %14, %cst_4 [1] : vector<8x128xf32> to vector<8xf32>
    %16 = vector.shape_cast %15 : vector<8xf32> to vector<8x1xf32>
    %17 = math.log %8 : vector<8x1xf32>
    %18 = arith.subf %16, %17 : vector<8x1xf32>
    %19 = math.exp %18 : vector<8x1xf32>
    %cst_5 = arith.constant 1.000000e+00 : f32
    %20 = vector.broadcast %cst_5 : f32 to vector<8x1xf32>
    %21 = arith.subf %20, %19 : vector<8x1xf32>
    %cst_6 = arith.constant 1.000000e+00 : f32
    %22 = vector.broadcast %cst_6 : f32 to vector<8x1xf32>
    %23 = arith.mulf %22, %21 : vector<8x1xf32>
    %24 = arith.mulf %23, %21 : vector<8x1xf32>
    %cst_7 = arith.constant -2.500000e-01 : f32
    %25 = vector.broadcast %cst_7 : f32 to vector<8x1xf32>
    %26 = arith.mulf %25, %24 : vector<8x1xf32>
    %27 = arith.mulf %26, %18 : vector<8x1xf32>
    %28 = tpu.iota {dimensions = array<i32: 0>} : vector<8x1xi32>
    %c8_i32 = arith.constant 8 : i32
    %29 = arith.muli %arg0, %c8_i32 : i32
    %30 = vector.broadcast %29 : i32 to vector<8x1xi32>
    %31 = arith.addi %28, %30 : vector<8x1xi32>
    %c8_i32_8 = arith.constant 8 : i32
    %32 = vector.broadcast %c8_i32_8 : i32 to vector<8x1xi32>
    %33 = arith.cmpi slt, %31, %32 : vector<8x1xi32>
    %cst_9 = arith.constant 0.000000e+00 : f32
    %34 = vector.broadcast %cst_9 : f32 to vector<8x1xf32>
    %35 = arith.select %33, %27, %34 : vector<8x1xi1>, vector<8x1xf32>
    %36 = vector.shape_cast %35 : vector<8x1xf32> to vector<1x8x1xf32>
    %cst_10 = arith.constant dense<0.000000e+00> : vector<1xf32>
    %37 = vector.multi_reduction <add>, %36, %cst_10 [1, 2] : vector<1x8x1xf32> to vector<1xf32>
    %38 = vector.shape_cast %37 : vector<1xf32> to vector<1x1x1xf32>
    %39 = vector.extract %38[0, 0, 0] : f32 from vector<1x1x1xf32>
    %c0_11 = arith.constant 0 : index
    %c0_12 = arith.constant 0 : index
    %40 = memref.load %arg3[%c0_11, %c0_12] : memref<1x1xf32, #tpu.memory_space<smem>>
    memref.store %39, %arg3[%c0_11, %c0_12] : memref<1x1xf32, #tpu.memory_space<smem>>
    return
  }
  func.func @transform_0(%arg0: i32) -> (i32, i32) {
    %c0_i32 = arith.constant 0 : i32
    %c0_i32_0 = arith.constant 0 : i32
    return %arg0, %c0_i32 : i32, i32
  }
  func.func @transform_1(%arg0: i32) -> (i32, i32) {
    %c0_i32 = arith.constant 0 : i32
    %c0_i32_0 = arith.constant 0 : i32
    return %arg0, %c0_i32 : i32, i32
  }
  func.func @transform_2(%arg0: i32) -> (i32, i32) {
    %c0_i32 = arith.constant 0 : i32
    %c0_i32_0 = arith.constant 0 : i32
    return %arg0, %c0_i32 : i32, i32
  }
}

</mosaic_0001>

<llo_original>
// kernel: tpu_custom_call.1
$region0: #{tpu_custom_call.1}
  #allocation0 [shape = 'u32[]', space=smem, size = 0x4, offset = 0x4, fixed_abs, tag = 'smem constant byte address 0x4 - core index']
  #allocation1 [shape = 'u32[144,128]{1,0:T(1,128)}', space=vmem, size = 0x12000, scoped, tag = 'internal scratch']
  %s0 = inlined_call_operand.vmem [shape: f32[8,128], index: 0, kind: input, shape index: {}]
  %s1 = inlined_call_operand.vmem [shape: s32[8,1], index: 1, kind: input, shape index: {}]
  %s2 = inlined_call_operand.hbm [shape: f32[1,1], index: 2, kind: output, shape index: {}]
  %s3 = sld [smem:[#allocation0]]
  $region18: #{tpu_custom_call.1} parent=0
    _
  %s5 = ssub.s32 1, %s3
  %s6 = scalar_select 0, %s5, %s3
  $region1: #{tpu_custom_call.1} parent=0
    #allocation2 [shape = 'u8[512]{0}', space=smem, size = 0x200, scoped, tag = 'output window, operand 0, single buffered']
    #allocation3 [shape = 's32[1]{0}', space=sflag, size = 0x4, scoped, tag = 'scoped memory for tpu_custom_call.1']
    %7 = vsyncpa [#allocation3], 0
    // Predicated region
    $region2: #{tpu_custom_call.1} parent=1 // pred_check
      _
    $region3: #{tpu_custom_call.1} parent=1 // pred_check_branch
      %9 = sbr.rel (0) target = $region5
    $region4: #{tpu_custom_call.1} parent=1 // pred_region
      _
    $region5: #{tpu_custom_call.1} parent=1 // pred_fallthru
      _
    // Predicated region
    $region6: #{tpu_custom_call.1} parent=1 // pred_check
      _
    $region7: #{tpu_custom_call.1} parent=1 // pred_check_branch
      %11 = sbr.rel (0) target = $region9
    $region8: #{tpu_custom_call.1} parent=1 // pred_region
      _
    $region9: #{tpu_custom_call.1} parent=1 // pred_fallthru
      _
    %v12 = vld [vmem:[%s0] sm:$0xff]
    %v13 = vld [vmem:[%s1] sm:$0xff]
    %14 = vmax.xlane.f32.xlu0 %v12
    %v15 = vpop.xlane.xlu0 %14
    %v16 = vsub.f32 %v12, %v15
    %v17 = vmul.f32 %v16, 1.442695
    %v18 = vpow.pop %v17
    %19 = vadd.xlane.f32.xlu0 %v18
    %v20 = vpop.xlane.xlu0 %19
    %v21 = vlaneseq
    %v22 = vand.u32 %v21, 127
    %23 = vset.pattern.permute.xlu0 0
    %24 = vperm.xlu0 %23, %v13
    %v25 = vpop.permute.xlu0 %24
    %vm26 = vcmp.eq.s32.totalorder %v22, %v25
    %v27 = vsel %vm26, 1, 0
    %v28 = vcvt.s32.f32 %v27
    %v29 = vmul.f32 %v16, %v28
    %30 = vadd.xlane.f32.xlu0 %v29
    %v31 = vpop.xlane.xlu0 %30
    %v32 = vlog2.pop %v20
    %v33 = vmul.f32 %v32, 0.6931472
    %v34 = vsub.f32 %v31, %v33
    %v35 = vmul.f32 %v34, 1.442695
    %v36 = vpow.pop %v35
    %v37 = vsub.f32 1.0, %v36
    %v38 = vmul.f32 %v37, %v37
    %v39 = vmul.f32 %v38, -0.25
    %v40 = vmul.f32 %v39, %v34
    %v41 = vlaneseq
    %v42 = vshrl.u32 %v41, 7
    %s43 = smul.u32 0, 8
    %v44 = vstv %s43
    %v45 = vadd.s32 %v42, %v44
    %vm46 = vcmp.lt.s32.totalorder %v45, 8
    %v47 = vsel %vm46, %v40, 0.0
    %vm48 = vcmask 7168
    %v49 = vsel %vm48, %v47, 0.0
    %50 = vadd.xlane.f32.xlu0 %v49
    %v51 = vpop.xlane.xlu0 %50
    %v52 = vrot.slane %v51, 4
    %v53 = vadd.f32 %v51, %v52
    %v54 = vrot.slane %v53, 2
    %v55 = vadd.f32 %v53, %v54
    %v56 = vrot.slane %v55, 1
    %v57 = vadd.f32 %v55, %v56
    %s58 = vtos %v57
    %s59 = scalar_lea.smem [#allocation2], 0
    %60 = sst [smem:[%s59]] %s58
    // Predicated region
    $region10: #{tpu_custom_call.1} parent=1 // pred_check
      _
    $region11: #{tpu_custom_call.1} parent=1 // pred_check_branch
      %62 = sbr.rel (0) target = $region13
    $region12: #{tpu_custom_call.1} parent=1 // pred_region
      %s64 = ssub.s32 16, 16
      %65 = vsyncadd [#allocation3], %s64
      %68 = dma.smem_to_hbm [#allocation2], 16, %s2, [#allocation3]
    $region13: #{tpu_custom_call.1} parent=1 // pred_fallthru
      _
    // Predicated region
    $region14: #{tpu_custom_call.1} parent=1 // pred_check
      _
    $region15: #{tpu_custom_call.1} parent=1 // pred_check_branch
      %70 = sbr.rel (0) target = $region17
    $region16: #{tpu_custom_call.1} parent=1 // pred_region
      %71 = dma.done [#allocation3], 16
    $region17: #{tpu_custom_call.1} parent=1 // pred_fallthru
      _
    %72 = sfence
    %73 = vsyncpa [#allocation3], 1

</llo_original>
